<compile_context>
chip_gen: v6e
topology: v6e:2x2x1
jax: 0.10.0
libtpu: 0.0.40
codegen_flags: <defaults>
</compile_context>

<pallas_src>
from functools import partial

import jax
import jax.numpy as jnp
from jax import lax
from jax.experimental import pallas as pl
from jax.experimental.pallas import tpu as pltpu


# ----------------------------------------------------------------------------
# Pass 1: fused-in-spirit QKV projection (three bf16 matmuls, tiled over N).
# ----------------------------------------------------------------------------
def pam_qkv_kernel(x_ref, wq_ref, wk_ref, wv_ref, bq_ref, bk_ref, bv_ref,
                   q_ref, k_ref, v_ref):
    # x_ref : (C, TQ) f32 tile; w* bf16; b* f32 column vectors.
    x = x_ref[...].astype(jnp.bfloat16)                       # bf16 MXU operands
    q_ref[...] = (jnp.dot(wq_ref[...], x, preferred_element_type=jnp.float32)
                  + bq_ref[...]).astype(jnp.bfloat16)
    k_ref[...] = (jnp.dot(wk_ref[...], x, preferred_element_type=jnp.float32)
                  + bk_ref[...]).astype(jnp.bfloat16)
    v_ref[...] = (jnp.dot(wv_ref[...], x, preferred_element_type=jnp.float32)
                  + bv_ref[...]).astype(jnp.bfloat16)


# ----------------------------------------------------------------------------
# Pass 2: query-tiled position attention + residual.
# ----------------------------------------------------------------------------
def pam_attn_kernel(q_ref, k_ref, v_ref, xr_ref, gamma_ref, o_ref,
                    *, exp_dtype, n_valid, n_padded):
    # q_ref : (C8, TQ) bf16   query tile
    # k_ref : (C8, Np) bf16   all keys for this batch element (resident)
    # v_ref : (C,  Np) bf16   all values (resident)
    # xr_ref: (C,  TQ) f32    residual slab
    # o_ref : (C,  TQ) f32
    # energy^T[j, i] = <k[:, j], q[:, i]>  -> (Np, TQ); softmax over axis 0.
    energy = lax.dot_general(
        k_ref[...], q_ref[...],
        dimension_numbers=(((0,), (0,)), ((), ())),
        preferred_element_type=jnp.float32)                   # (Np, TQ) f32

    if n_padded != n_valid:
        key_ids = lax.broadcasted_iota(jnp.int32, energy.shape, 0)
        energy = jnp.where(key_ids < n_valid, energy, -jnp.inf)

    m = jnp.max(energy, axis=0, keepdims=True)                # (1, TQ) f32
    p = jnp.exp((energy - m).astype(exp_dtype))               # (Np, TQ)
    s = jnp.sum(p, axis=0, keepdims=True, dtype=jnp.float32)  # (1, TQ) f32

    p_mx = p if p.dtype == jnp.bfloat16 else p.astype(jnp.bfloat16)
    # out[c, i] = sum_j v[c, j] * p[j, i]   (normalization folded in afterwards)
    out = lax.dot_general(
        v_ref[...], p_mx,
        dimension_numbers=(((1,), (0,)), ((), ())),
        preferred_element_type=jnp.float32)                   # (C, TQ) f32

    inv = 1.0 / s                                             # exact, only TQ elems
    gamma = gamma_ref[0]
    o_ref[...] = (gamma * (out * inv) + xr_ref[...]).astype(o_ref.dtype)


# ----------------------------------------------------------------------------
# Host-side helpers.
# ----------------------------------------------------------------------------
def _device_kind():
    try:
        return jax.devices()[0].device_kind.lower()
    except Exception:
        return ""


def _vmem_limit_bytes():
    mib = 1024 * 1024
    try:
        cap = pltpu.get_tpu_info().vmem_capacity_bytes
    except Exception:
        return 64 * mib                       # conservative, known-good default
    return int(min(cap - 12 * mib, 100 * mib))


def _pick_query_tile(n_padded, candidates):
    # Prefer the largest candidate dividing the (padded) pixel count, with at
    # least 2 tiles so the resident K/V path is reused and the pipeline has
    # multiple steps; n_padded is a multiple of 128 so 128 always works.
    for tq in candidates:
        if n_padded % tq == 0 and n_padded // tq >= 2:
            return tq
    for tq in candidates:
        if n_padded % tq == 0:
            return tq
    return 128


def pam_forward(x, wq, bq, wk, bk, wv, bv, gamma):
    """x: (B, C, H, W) float32. Same semantics as PAM_Module.forward."""
    B, C, H, W = x.shape
    N = H * W
    C8 = wq.shape[0]
    assert C8 >= 1 and wv.shape[0] == C

    kind = _device_kind()
    is_v7 = ("v7" in kind) or ("tpu7" in kind) or ("7x" in kind)
    is_pre_v6 = any(t in kind for t in ("v2", "v3", "v4", "v5"))
    exp_dtype = jnp.float32 if is_pre_v6 else jnp.bfloat16    # bf16 EUP on v6e/v7x
    tq_candidates = (256, 128) if is_v7 else (512, 256, 128)  # VMEM cap on v7x

    Np = ((N + 127) // 128) * 128
    TQ = _pick_query_tile(Np, tq_candidates)
    NQ = Np // TQ

    x2 = x.reshape(B, C, N).astype(jnp.float32)
    if Np != N:
        x2 = jnp.pad(x2, ((0, 0), (0, 0), (0, Np - N)))

    wq_b = wq.astype(jnp.bfloat16)
    wk_b = wk.astype(jnp.bfloat16)
    wv_b = wv.astype(jnp.bfloat16)
    bq2 = bq.reshape(C8, 1).astype(jnp.float32)
    bk2 = bk.reshape(C8, 1).astype(jnp.float32)
    bv2 = bv.reshape(C, 1).astype(jnp.float32)
    gamma1 = gamma.reshape(1).astype(jnp.float32)

    vmem_limit = _vmem_limit_bytes()
    cparams = pltpu.CompilerParams(
        dimension_semantics=("parallel", "parallel"),
        vmem_limit_bytes=vmem_limit,
    )

    # ---- Pass 1: QKV projection (bf16 matmuls, tiled over pixels). ----------
    q, k, v = pl.pallas_call(
        pam_qkv_kernel,
        out_shape=(
            jax.ShapeDtypeStruct((B, C8, Np), jnp.bfloat16),
            jax.ShapeDtypeStruct((B, C8, Np), jnp.bfloat16),
            jax.ShapeDtypeStruct((B, C, Np), jnp.bfloat16),
        ),
        grid_spec=pltpu.PrefetchScalarGridSpec(
            num_scalar_prefetch=0,
            grid=(B, NQ),
            in_specs=[
                pl.BlockSpec((None, C, TQ), lambda b, j: (b, 0, j)),  # x tile
                pl.BlockSpec((C8, C), lambda b, j: (0, 0)),           # wq
                pl.BlockSpec((C8, C), lambda b, j: (0, 0)),           # wk
                pl.BlockSpec((C, C), lambda b, j: (0, 0)),            # wv
                pl.BlockSpec((C8, 1), lambda b, j: (0, 0)),           # bq
                pl.BlockSpec((C8, 1), lambda b, j: (0, 0)),           # bk
                pl.BlockSpec((C, 1), lambda b, j: (0, 0)),            # bv
            ],
            out_specs=[
                pl.BlockSpec((None, C8, TQ), lambda b, j: (b, 0, j)),
                pl.BlockSpec((None, C8, TQ), lambda b, j: (b, 0, j)),
                pl.BlockSpec((None, C, TQ), lambda b, j: (b, 0, j)),
            ],
        ),
        compiler_params=cparams,
    )(x2, wq_b, wk_b, wv_b, bq2, bk2, bv2)

    # ---- Pass 2: attention + residual, tiled over query pixels. -------------
    attn_kernel = partial(pam_attn_kernel,
                          exp_dtype=exp_dtype, n_valid=N, n_padded=Np)
    out = pl.pallas_call(
        attn_kernel,
        out_shape=jax.ShapeDtypeStruct((B, C, Np), jnp.float32),
        grid_spec=pltpu.PrefetchScalarGridSpec(
            num_scalar_prefetch=0,
            grid=(B, NQ),
            in_specs=[
                pl.BlockSpec((None, C8, TQ), lambda b, qi: (b, 0, qi)),  # q tile
                pl.BlockSpec((None, C8, Np), lambda b, qi: (b, 0, 0)),   # k (resident)
                pl.BlockSpec((None, C, Np), lambda b, qi: (b, 0, 0)),    # v (resident)
                pl.BlockSpec((None, C, TQ), lambda b, qi: (b, 0, qi)),   # residual x tile
                pl.BlockSpec(memory_space=pltpu.SMEM),                   # gamma scalar
            ],
            out_specs=pl.BlockSpec((None, C, TQ), lambda b, qi: (b, 0, qi)),
        ),
        compiler_params=cparams,
    )(q, k, v, x2, gamma1)

    if Np != N:
        out = out[:, :, :N]
    return out.reshape(B, C, H, W)


def reference_forward(x, wq, bq, wk, bk, wv, bv, gamma):
    """Pure-JAX f32 reference mirroring the PyTorch forward exactly."""
    B, C, H, W = x.shape
    N = H * W
    x2 = x.reshape(B, C, N)
    q = jnp.einsum('oc,bcn->bon', wq, x2) + bq[None, :, None]   # (B, C8, N)
    k = jnp.einsum('oc,bcn->bon', wk, x2) + bk[None, :, None]   # (B, C8, N)
    v = jnp.einsum('oc,bcn->bon', wv, x2) + bv[None, :, None]   # (B, C,  N)
    energy = jnp.einsum('bci,bcj->bij', q, k)                   # (B, N, N)
    attn = jax.nn.softmax(energy, axis=-1)
    out = jnp.einsum('bcj,bij->bci', v, attn)                   # (B, C, N)
    out = out.reshape(B, C, H, W)
    return gamma * out + x


if __name__ == "__main__":
    B, C, H, W = 2, 16, 16, 16          # N = 256 -> two query tiles of 128
    C8 = C // 8

    key = jax.random.PRNGKey(0)
    kx, kq, kk, kv, kbq, kbk, kbv = jax.random.split(key, 7)

    x = jax.random.normal(kx, (B, C, H, W), dtype=jnp.float32)

    # 1x1 conv weights: PyTorch Conv2d weight (out, in, 1, 1) -> (out, in).
    wq = 0.1 * jax.random.normal(kq, (C8, C), dtype=jnp.float32)
    wk = 0.1 * jax.random.normal(kk, (C8, C), dtype=jnp.float32)
    wv = 0.1 * jax.random.normal(kv, (C, C), dtype=jnp.float32)
    bq = 0.1 * jax.random.normal(kbq, (C8,), dtype=jnp.float32)
    bk = 0.1 * jax.random.normal(kbk, (C8,), dtype=jnp.float32)
    bv = 0.1 * jax.random.normal(kbv, (C,), dtype=jnp.float32)
    # PyTorch inits gamma to 0 (out == x); use a nonzero value so the attention
    # path is actually exercised (forward semantics identical for any gamma).
    gamma = jnp.array(0.5, dtype=jnp.float32)

    out = pam_forward(x, wq, bq, wk, bk, wv, bv, gamma)
    out = jax.block_until_ready(out)

    ref = reference_forward(x, wq, bq, wk, bk, wv, bv, gamma)
    assert out.shape == (B, C, H, W)
    # Tolerance accounts for the bf16 MXU path (f32 accumulation, f32 row-sums).
    assert jnp.allclose(out, ref, rtol=2e-2, atol=2e-2), (
        "mismatch vs reference: max abs err = "
        f"{float(jnp.max(jnp.abs(out - ref)))}")

    print("KERNEL_OK")
</pallas_src>

<mosaic_0001>
module attributes {stable_mosaic.version = 11 : i64} {
  func.func @pam_qkv_kernel(%arg0: i32, %arg1: i32, %arg2: memref<1x16x128xf32, #tpu.memory_space<vmem>>, %arg3: memref<2x16xbf16, #tpu.memory_space<vmem>>, %arg4: memref<2x16xbf16, #tpu.memory_space<vmem>>, %arg5: memref<16x16xbf16, #tpu.memory_space<vmem>>, %arg6: memref<2x1xf32, #tpu.memory_space<vmem>>, %arg7: memref<2x1xf32, #tpu.memory_space<vmem>>, %arg8: memref<16x1xf32, #tpu.memory_space<vmem>>, %arg9: memref<1x2x128xbf16, #tpu.memory_space<vmem>>, %arg10: memref<1x2x128xbf16, #tpu.memory_space<vmem>>, %arg11: memref<1x16x128xbf16, #tpu.memory_space<vmem>>) attributes {dimension_semantics = [#tpu.dimension_semantics<parallel>, #tpu.dimension_semantics<parallel>], iteration_bounds = array<i64: 2, 2>, scalar_prefetch = 0 : i64, scratch_operands = 0 : i64, tpu.core_type = #tpu.core_type<tc>, window_params = [{transform_indices = @transform_0, window_bounds = array<i64: 1, 16, 128>}, {pipeline_mode = #tpu.pipeline_mode<synchronous>, transform_indices = @transform_1, window_bounds = array<i64: 2, 16>}, {pipeline_mode = #tpu.pipeline_mode<synchronous>, transform_indices = @transform_2, window_bounds = array<i64: 2, 16>}, {pipeline_mode = #tpu.pipeline_mode<synchronous>, transform_indices = @transform_3, window_bounds = array<i64: 16, 16>}, {pipeline_mode = #tpu.pipeline_mode<synchronous>, transform_indices = @transform_4, window_bounds = array<i64: 2, 1>}, {pipeline_mode = #tpu.pipeline_mode<synchronous>, transform_indices = @transform_5, window_bounds = array<i64: 2, 1>}, {pipeline_mode = #tpu.pipeline_mode<synchronous>, transform_indices = @transform_6, window_bounds = array<i64: 16, 1>}, {transform_indices = @transform_7, window_bounds = array<i64: 1, 2, 128>}, {transform_indices = @transform_8, window_bounds = array<i64: 1, 2, 128>}, {transform_indices = @transform_9, window_bounds = array<i64: 1, 16, 128>}]} {
    %c0 = arith.constant 0 : index
    %c0_0 = arith.constant 0 : index
    %c0_1 = arith.constant 0 : index
    %0 = vector.load %arg2[%c0, %c0_0, %c0_1] : memref<1x16x128xf32, #tpu.memory_space<vmem>>, vector<1x16x128xf32>
    %1 = vector.shape_cast %0 : vector<1x16x128xf32> to vector<16x128xf32>
    %2 = arith.truncf %1 : vector<16x128xf32> to vector<16x128xbf16>
    %c0_2 = arith.constant 0 : index
    %c0_3 = arith.constant 0 : index
    %3 = vector.load %arg3[%c0_2, %c0_3] : memref<2x16xbf16, #tpu.memory_space<vmem>>, vector<2x16xbf16>
    %cst = arith.constant dense<0.000000e+00> : vector<2x128xf32>
    %4 = tpu.matmul %3, %2, %cst {dimension_numbers = #tpu.dot_dimension_numbers<[1], [0], [0], [1], [0, 0, 1, 1], [], []>} : vector<2x16xbf16>, vector<16x128xbf16>, vector<2x128xf32> -> vector<2x128xf32>
    %c0_4 = arith.constant 0 : index
    %c0_5 = arith.constant 0 : index
    %5 = vector.load %arg6[%c0_4, %c0_5] : memref<2x1xf32, #tpu.memory_space<vmem>>, vector<2x1xf32>
    %6 = vector.broadcast %5 : vector<2x1xf32> to vector<2x128xf32>
    %7 = arith.addf %4, %6 : vector<2x128xf32>
    %8 = arith.truncf %7 : vector<2x128xf32> to vector<2x128xbf16>
    %c0_6 = arith.constant 0 : index
    %c0_7 = arith.constant 0 : index
    %c0_8 = arith.constant 0 : index
    %9 = vector.load %arg9[%c0_6, %c0_7, %c0_8] : memref<1x2x128xbf16, #tpu.memory_space<vmem>>, vector<1x2x128xbf16>
    %10 = vector.shape_cast %9 : vector<1x2x128xbf16> to vector<2x128xbf16>
    %11 = vector.shape_cast %8 : vector<2x128xbf16> to vector<1x2x128xbf16>
    tpu.vector_store %arg9[%c0_6, %c0_7, %c0_8], %11 {strides = array<i32>} : memref<1x2x128xbf16, #tpu.memory_space<vmem>>, vector<1x2x128xbf16>,
    %c0_9 = arith.constant 0 : index
    %c0_10 = arith.constant 0 : index
    %12 = vector.load %arg4[%c0_9, %c0_10] : memref<2x16xbf16, #tpu.memory_space<vmem>>, vector<2x16xbf16>
    %cst_11 = arith.constant dense<0.000000e+00> : vector<2x128xf32>
    %13 = tpu.matmul %12, %2, %cst_11 {dimension_numbers = #tpu.dot_dimension_numbers<[1], [0], [0], [1], [0, 0, 1, 1], [], []>} : vector<2x16xbf16>, vector<16x128xbf16>, vector<2x128xf32> -> vector<2x128xf32>
    %c0_12 = arith.constant 0 : index
    %c0_13 = arith.constant 0 : index
    %14 = vector.load %arg7[%c0_12, %c0_13] : memref<2x1xf32, #tpu.memory_space<vmem>>, vector<2x1xf32>
    %15 = vector.broadcast %14 : vector<2x1xf32> to vector<2x128xf32>
    %16 = arith.addf %13, %15 : vector<2x128xf32>
    %17 = arith.truncf %16 : vector<2x128xf32> to vector<2x128xbf16>
    %c0_14 = arith.constant 0 : index
    %c0_15 = arith.constant 0 : index
    %c0_16 = arith.constant 0 : index
    %18 = vector.load %arg10[%c0_14, %c0_15, %c0_16] : memref<1x2x128xbf16, #tpu.memory_space<vmem>>, vector<1x2x128xbf16>
    %19 = vector.shape_cast %18 : vector<1x2x128xbf16> to vector<2x128xbf16>
    %20 = vector.shape_cast %17 : vector<2x128xbf16> to vector<1x2x128xbf16>
    tpu.vector_store %arg10[%c0_14, %c0_15, %c0_16], %20 {strides = array<i32>} : memref<1x2x128xbf16, #tpu.memory_space<vmem>>, vector<1x2x128xbf16>,
    %c0_17 = arith.constant 0 : index
    %c0_18 = arith.constant 0 : index
    %21 = vector.load %arg5[%c0_17, %c0_18] : memref<16x16xbf16, #tpu.memory_space<vmem>>, vector<16x16xbf16>
    %cst_19 = arith.constant dense<0.000000e+00> : vector<16x128xf32>
    %22 = tpu.matmul %21, %2, %cst_19 {dimension_numbers = #tpu.dot_dimension_numbers<[1], [0], [0], [1], [0, 0, 1, 1], [], []>} : vector<16x16xbf16>, vector<16x128xbf16>, vector<16x128xf32> -> vector<16x128xf32>
    %c0_20 = arith.constant 0 : index
    %c0_21 = arith.constant 0 : index
    %23 = vector.load %arg8[%c0_20, %c0_21] : memref<16x1xf32, #tpu.memory_space<vmem>>, vector<16x1xf32>
    %24 = vector.broadcast %23 : vector<16x1xf32> to vector<16x128xf32>
    %25 = arith.addf %22, %24 : vector<16x128xf32>
    %26 = arith.truncf %25 : vector<16x128xf32> to vector<16x128xbf16>
    %c0_22 = arith.constant 0 : index
    %c0_23 = arith.constant 0 : index
    %c0_24 = arith.constant 0 : index
    %27 = vector.load %arg11[%c0_22, %c0_23, %c0_24] : memref<1x16x128xbf16, #tpu.memory_space<vmem>>, vector<1x16x128xbf16>
    %28 = vector.shape_cast %27 : vector<1x16x128xbf16> to vector<16x128xbf16>
    %29 = vector.shape_cast %26 : vector<16x128xbf16> to vector<1x16x128xbf16>
    tpu.vector_store %arg11[%c0_22, %c0_23, %c0_24], %29 {strides = array<i32>} : memref<1x16x128xbf16, #tpu.memory_space<vmem>>, vector<1x16x128xbf16>,
    return
  }
  func.func @transform_0(%arg0: i32, %arg1: i32) -> (i32, i32, i32) {
    %c0_i32 = arith.constant 0 : i32
    %c0_i32_0 = arith.constant 0 : i32
    return %arg0, %c0_i32, %arg1 : i32, i32, i32
  }
  func.func @transform_1(%arg0: i32, %arg1: i32) -> (i32, i32) {
    %c0_i32 = arith.constant 0 : i32
    %c0_i32_0 = arith.constant 0 : i32
    %c0_i32_1 = arith.constant 0 : i32
    return %c0_i32, %c0_i32_0 : i32, i32
  }
  func.func @transform_2(%arg0: i32, %arg1: i32) -> (i32, i32) {
    %c0_i32 = arith.constant 0 : i32
    %c0_i32_0 = arith.constant 0 : i32
    %c0_i32_1 = arith.constant 0 : i32
    return %c0_i32, %c0_i32_0 : i32, i32
  }
  func.func @transform_3(%arg0: i32, %arg1: i32) -> (i32, i32) {
    %c0_i32 = arith.constant 0 : i32
    %c0_i32_0 = arith.constant 0 : i32
    %c0_i32_1 = arith.constant 0 : i32
    return %c0_i32, %c0_i32_0 : i32, i32
  }
  func.func @transform_4(%arg0: i32, %arg1: i32) -> (i32, i32) {
    %c0_i32 = arith.constant 0 : i32
    %c0_i32_0 = arith.constant 0 : i32
    %c0_i32_1 = arith.constant 0 : i32
    return %c0_i32, %c0_i32_0 : i32, i32
  }
  func.func @transform_5(%arg0: i32, %arg1: i32) -> (i32, i32) {
    %c0_i32 = arith.constant 0 : i32
    %c0_i32_0 = arith.constant 0 : i32
    %c0_i32_1 = arith.constant 0 : i32
    return %c0_i32, %c0_i32_0 : i32, i32
  }
  func.func @transform_6(%arg0: i32, %arg1: i32) -> (i32, i32) {
    %c0_i32 = arith.constant 0 : i32
    %c0_i32_0 = arith.constant 0 : i32
    %c0_i32_1 = arith.constant 0 : i32
    return %c0_i32, %c0_i32_0 : i32, i32
  }
  func.func @transform_7(%arg0: i32, %arg1: i32) -> (i32, i32, i32) {
    %c0_i32 = arith.constant 0 : i32
    %c0_i32_0 = arith.constant 0 : i32
    return %arg0, %c0_i32, %arg1 : i32, i32, i32
  }
  func.func @transform_8(%arg0: i32, %arg1: i32) -> (i32, i32, i32) {
    %c0_i32 = arith.constant 0 : i32
    %c0_i32_0 = arith.constant 0 : i32
    return %arg0, %c0_i32, %arg1 : i32, i32, i32
  }
  func.func @transform_9(%arg0: i32, %arg1: i32) -> (i32, i32, i32) {
    %c0_i32 = arith.constant 0 : i32
    %c0_i32_0 = arith.constant 0 : i32
    return %arg0, %c0_i32, %arg1 : i32, i32, i32
  }
}

</mosaic_0001>

<llo_original>
// kernel: tpu_custom_call.1
$region0: #{tpu_custom_call.1}
  #allocation0 [shape = 'u32[]', space=smem, size = 0x4, offset = 0x4, fixed_abs, tag = 'smem constant byte address 0x4 - core index']
  #allocation1 [shape = 'u32[144,128]{1,0:T(1,128)}', space=vmem, size = 0x12000, scoped, tag = 'internal scratch']
  %s0 = inlined_call_operand.hbm [shape: f32[2,16,256], index: 0, kind: input, shape index: {}]
  %s1 = inlined_call_operand.vmem [shape: bf16[2,16], index: 1, kind: input, shape index: {}]
  %s2 = inlined_call_operand.vmem [shape: bf16[2,16], index: 2, kind: input, shape index: {}]
  %s3 = inlined_call_operand.vmem [shape: bf16[16,16], index: 3, kind: input, shape index: {}]
  %s4 = inlined_call_operand.vmem [shape: f32[2,1], index: 4, kind: input, shape index: {}]
  %s5 = inlined_call_operand.vmem [shape: f32[2,1], index: 5, kind: input, shape index: {}]
  %s6 = inlined_call_operand.vmem [shape: f32[16,1], index: 6, kind: input, shape index: {}]
  %s7 = inlined_call_operand.hbm [shape: bf16[2,2,256], index: 7, kind: output, shape index: {0}]
  %s8 = inlined_call_operand.hbm [shape: bf16[2,2,256], index: 8, kind: output, shape index: {1}]
  %s9 = inlined_call_operand.hbm [shape: bf16[2,16,256], index: 9, kind: output, shape index: {2}]
  %10 = xla_tuple %s7, %s8, %s9
  %s11 = sld [smem:[#allocation0]]
  $region81: #{tpu_custom_call.1} parent=0
    _
  %s13 = ssub.s32 1, %s11
  %s14 = scalar_select 0, %s13, %s11
  $region1: #{tpu_custom_call.1} parent=0
    #allocation2 [shape = 'u8[16384]{0}', space=vmem, size = 0x4000, scoped, tag = 'input window, operand 0']
    #allocation3 [shape = 's32[2]{0}', space=sflag, size = 0x8, scoped, tag = 'scoped memory for tpu_custom_call.1']
    #allocation4 [shape = 's32[2]{0}', space=sflag, size = 0x8, scoped, tag = 'scoped memory for tpu_custom_call.1']
    #allocation5 [shape = 'u8[1024]{0}', space=vmem, size = 0x400, scoped, tag = 'output window, operand 0']
    #allocation6 [shape = 'u8[1024]{0}', space=vmem, size = 0x400, scoped, tag = 'output window, operand 1']
    #allocation7 [shape = 's32[2]{0}', space=sflag, size = 0x8, scoped, tag = 'scoped memory for tpu_custom_call.1']
    #allocation8 [shape = 'u8[8192]{0}', space=vmem, size = 0x2000, scoped, tag = 'output window, operand 2']
    %15 = vsyncpa [#allocation3], 0
    %s16 = scalar_lea.sflag [#allocation3], 1
    %17 = vsyncpa %s16, 0
    %18 = vsyncpa [#allocation4], 0
    %s19 = scalar_lea.sflag [#allocation4], 1
    %20 = vsyncpa %s19, 0
    %21 = vsyncpa [#allocation7], 0
    %s22 = scalar_lea.sflag [#allocation7], 1
    %23 = vsyncpa %s22, 0
    loop: start=0, step=1, limit=6
    $region2: #{tpu_custom_call.1} parent=1 // loop_pre_header
      _
    $region3: #{tpu_custom_call.1} parent=1 // loop_header
      %s25 = sphi 0, %s29
      %p26 = scmp.ge.s32.totalorder %s25, 6
      %s32 = sphi 0, %s44
      %s33 = sphi 0, %s40
      %s34 = sphi 0, %s32
      %s35 = sphi 0, %s33
      %s36 = sphi 0, %s34
      %s37 = sphi 0, %s35
      %s49 = sphi 0, %s51
      %s52 = sphi 0, %s49
      %s53 = sphi 0, %s52
      %s69 = sphi 0, %s53
      %s73 = sphi 0, %s73
      %s75 = sphi 0, %s73
      %s76 = sphi 0, %s75
      %s90 = sphi 0, %s76
      %s94 = sphi 0, %s94
      %s96 = sphi 0, %s94
      %s97 = sphi 0, %s96
      %s111 = sphi 0, %s97
      %s115 = sphi 0, %s115
      %s117 = sphi 0, %s115
      %s118 = sphi 0, %s117
      %s132 = sphi 0, %s118
      %s136 = sphi 0, %s136
      %s138 = sphi 0, %s136
      %s139 = sphi 0, %s138
      %s153 = sphi 0, %s139
      %s157 = sphi 0, %s157
      %s159 = sphi 0, %s157
      %s160 = sphi 0, %s159
      %s174 = sphi 0, %s160
      %s178 = sphi 0, %s178
      %s180 = sphi 0, %s178
      %s181 = sphi 0, %s180
      %s195 = sphi 0, %s181
      %s203 = sphi 0, %s205
      %s206 = sphi 0, %s203
      %s207 = sphi 0, %s206
      %s223 = sphi 0, %s207
      %s231 = sphi 0, %s233
      %s234 = sphi 0, %s231
      %s235 = sphi 0, %s234
      %s251 = sphi 0, %s235
      %s259 = sphi 0, %s261
      %s262 = sphi 0, %s259
      %s263 = sphi 0, %s262
      %s279 = sphi 0, %s263
    $region4: #{tpu_custom_call.1} parent=1 // loop_header_branch
      %28 = sbr.rel (%p26) target = $region8
    $region5: #{tpu_custom_call.1} parent=1 // loop_body
      %s30 = ssub.s32 %s25, 1
      %s31 = ssub.s32 %s25, 2
      %s38 = sadd.s32 1, %s33
      %p39 = scmp.ge.s32.totalorder %s38, 2
      %s40 = scalar_select %p39, 0, %s38
      %s41 = sadd.s32 1, %s32
      %s42 = scalar_select %p39, %s41, %s32
      %p43 = scmp.ge.s32.totalorder %s42, 2
      %s44 = scalar_select %p43, 0, %s42
      %s45 = ssub.s32 %s32, %s44
      %s46 = ssub.s32 %s33, %s40
      %s47 = sor.u32 %s45, %s46
      %p48 = scmp.eq.s32.totalorder %s47, 0
      %s50 = sadd.s32 %s49, 1
      %s51 = scalar_select %p48, %s49, %s50
      %p54 = pneg %p48
      %p55 = scmp.eq.s32.totalorder %s25, 3
      %p56 = por %p54, %p55
      %p57 = scmp.ne.s32.totalorder %s49, %s52
      %p58 = scmp.eq.s32.totalorder %s25, 0
      %p59 = por %p57, %p58
      %p60 = scmp.ne.s32.totalorder %s49, %s52
      %p61 = scmp.eq.s32.totalorder %s30, 3
      %p62 = por %p60, %p61
      %p63 = scmp.ne.s32.totalorder %s52, %s53
      %p64 = scmp.eq.s32.totalorder %s30, 0
      %p65 = por %p63, %p64
      %p66 = scmp.ne.s32.totalorder %s52, %s53
      %p67 = scmp.eq.s32.totalorder %s31, 3
      %p68 = por %p66, %p67
      %p70 = scmp.ne.s32.totalorder %s53, %s69
      %p71 = scmp.eq.s32.totalorder %s31, 0
      %p72 = por %p70, %p71
      %s74 = sadd.s32 %s73, 1
      %p77 = scmp.eq.s32.totalorder %s25, 3
      %p78 = scmp.ne.s32.totalorder %s73, %s75
      %p79 = scmp.eq.s32.totalorder %s25, 0
      %p80 = por %p78, %p79
      %p81 = scmp.ne.s32.totalorder %s73, %s75
      %p82 = scmp.eq.s32.totalorder %s30, 3
      %p83 = por %p81, %p82
      %p84 = scmp.ne.s32.totalorder %s75, %s76
      %p85 = scmp.eq.s32.totalorder %s30, 0
      %p86 = por %p84, %p85
      %p87 = scmp.ne.s32.totalorder %s75, %s76
      %p88 = scmp.eq.s32.totalorder %s31, 3
      %p89 = por %p87, %p88
      %p91 = scmp.ne.s32.totalorder %s76, %s90
      %p92 = scmp.eq.s32.totalorder %s31, 0
      %p93 = por %p91, %p92
      %s95 = sadd.s32 %s94, 1
      %p98 = scmp.eq.s32.totalorder %s25, 3
      %p99 = scmp.ne.s32.totalorder %s94, %s96
      %p100 = scmp.eq.s32.totalorder %s25, 0
      %p101 = por %p99, %p100
      %p102 = scmp.ne.s32.totalorder %s94, %s96
      %p103 = scmp.eq.s32.totalorder %s30, 3
      %p104 = por %p102, %p103
      %p105 = scmp.ne.s32.totalorder %s96, %s97
      %p106 = scmp.eq.s32.totalorder %s30, 0
      %p107 = por %p105, %p106
      %p108 = scmp.ne.s32.totalorder %s96, %s97
      %p109 = scmp.eq.s32.totalorder %s31, 3
      %p110 = por %p108, %p109
      %p112 = scmp.ne.s32.totalorder %s97, %s111
      %p113 = scmp.eq.s32.totalorder %s31, 0
      %p114 = por %p112, %p113
      %s116 = sadd.s32 %s115, 1
      %p119 = scmp.eq.s32.totalorder %s25, 3
      %p120 = scmp.ne.s32.totalorder %s115, %s117
      %p121 = scmp.eq.s32.totalorder %s25, 0
      %p122 = por %p120, %p121
      %p123 = scmp.ne.s32.totalorder %s115, %s117
      %p124 = scmp.eq.s32.totalorder %s30, 3
      %p125 = por %p123, %p124
      %p126 = scmp.ne.s32.totalorder %s117, %s118
      %p127 = scmp.eq.s32.totalorder %s30, 0
      %p128 = por %p126, %p127
      %p129 = scmp.ne.s32.totalorder %s117, %s118
      %p130 = scmp.eq.s32.totalorder %s31, 3
      %p131 = por %p129, %p130
      %p133 = scmp.ne.s32.totalorder %s118, %s132
      %p134 = scmp.eq.s32.totalorder %s31, 0
      %p135 = por %p133, %p134
      %s137 = sadd.s32 %s136, 1
      %p140 = scmp.eq.s32.totalorder %s25, 3
      %p141 = scmp.ne.s32.totalorder %s136, %s138
      %p142 = scmp.eq.s32.totalorder %s25, 0
      %p143 = por %p141, %p142
      %p144 = scmp.ne.s32.totalorder %s136, %s138
      %p145 = scmp.eq.s32.totalorder %s30, 3
      %p146 = por %p144, %p145
      %p147 = scmp.ne.s32.totalorder %s138, %s139
      %p148 = scmp.eq.s32.totalorder %s30, 0
      %p149 = por %p147, %p148
      %p150 = scmp.ne.s32.totalorder %s138, %s139
      %p151 = scmp.eq.s32.totalorder %s31, 3
      %p152 = por %p150, %p151
      %p154 = scmp.ne.s32.totalorder %s139, %s153
      %p155 = scmp.eq.s32.totalorder %s31, 0
      %p156 = por %p154, %p155
      %s158 = sadd.s32 %s157, 1
      %p161 = scmp.eq.s32.totalorder %s25, 3
      %p162 = scmp.ne.s32.totalorder %s157, %s159
      %p163 = scmp.eq.s32.totalorder %s25, 0
      %p164 = por %p162, %p163
      %p165 = scmp.ne.s32.totalorder %s157, %s159
      %p166 = scmp.eq.s32.totalorder %s30, 3
      %p167 = por %p165, %p166
      %p168 = scmp.ne.s32.totalorder %s159, %s160
      %p169 = scmp.eq.s32.totalorder %s30, 0
      %p170 = por %p168, %p169
      %p171 = scmp.ne.s32.totalorder %s159, %s160
      %p172 = scmp.eq.s32.totalorder %s31, 3
      %p173 = por %p171, %p172
      %p175 = scmp.ne.s32.totalorder %s160, %s174
      %p176 = scmp.eq.s32.totalorder %s31, 0
      %p177 = por %p175, %p176
      %s179 = sadd.s32 %s178, 1
      %p182 = scmp.eq.s32.totalorder %s25, 3
      %p183 = scmp.ne.s32.totalorder %s178, %s180
      %p184 = scmp.eq.s32.totalorder %s25, 0
      %p185 = por %p183, %p184
      %p186 = scmp.ne.s32.totalorder %s178, %s180
      %p187 = scmp.eq.s32.totalorder %s30, 3
      %p188 = por %p186, %p187
      %p189 = scmp.ne.s32.totalorder %s180, %s181
      %p190 = scmp.eq.s32.totalorder %s30, 0
      %p191 = por %p189, %p190
      %p192 = scmp.ne.s32.totalorder %s180, %s181
      %p193 = scmp.eq.s32.totalorder %s31, 3
      %p194 = por %p192, %p193
      %p196 = scmp.ne.s32.totalorder %s181, %s195
      %p197 = scmp.eq.s32.totalorder %s31, 0
      %p198 = por %p196, %p197
      %s199 = ssub.s32 %s32, %s44
      %s200 = ssub.s32 %s33, %s40
      %s201 = sor.u32 %s199, %s200
      %p202 = scmp.eq.s32.totalorder %s201, 0
      %s204 = sadd.s32 %s203, 1
      %s205 = scalar_select %p202, %s203, %s204
      %p208 = pneg %p202
      %p209 = scmp.eq.s32.totalorder %s25, 3
      %p210 = por %p208, %p209
      %p211 = scmp.ne.s32.totalorder %s203, %s206
      %p212 = scmp.eq.s32.totalorder %s25, 0
      %p213 = por %p211, %p212
      %p214 = scmp.ne.s32.totalorder %s203, %s206
      %p215 = scmp.eq.s32.totalorder %s30, 3
      %p216 = por %p214, %p215
      %p217 = scmp.ne.s32.totalorder %s206, %s207
      %p218 = scmp.eq.s32.totalorder %s30, 0
      %p219 = por %p217, %p218
      %p220 = scmp.ne.s32.totalorder %s206, %s207
      %p221 = scmp.eq.s32.totalorder %s31, 3
      %p222 = por %p220, %p221
      %p224 = scmp.ne.s32.totalorder %s207, %s223
      %p225 = scmp.eq.s32.totalorder %s31, 0
      %p226 = por %p224, %p225
      %s227 = ssub.s32 %s32, %s44
      %s228 = ssub.s32 %s33, %s40
      %s229 = sor.u32 %s227, %s228
      %p230 = scmp.eq.s32.totalorder %s229, 0
      %s232 = sadd.s32 %s231, 1
      %s233 = scalar_select %p230, %s231, %s232
      %p236 = pneg %p230
      %p237 = scmp.eq.s32.totalorder %s25, 3
      %p238 = por %p236, %p237
      %p239 = scmp.ne.s32.totalorder %s231, %s234
      %p240 = scmp.eq.s32.totalorder %s25, 0
      %p241 = por %p239, %p240
      %p242 = scmp.ne.s32.totalorder %s231, %s234
      %p243 = scmp.eq.s32.totalorder %s30, 3
      %p244 = por %p242, %p243
      %p245 = scmp.ne.s32.totalorder %s234, %s235
      %p246 = scmp.eq.s32.totalorder %s30, 0
      %p247 = por %p245, %p246
      %p248 = scmp.ne.s32.totalorder %s234, %s235
      %p249 = scmp.eq.s32.totalorder %s31, 3
      %p250 = por %p248, %p249
      %p252 = scmp.ne.s32.totalorder %s235, %s251
      %p253 = scmp.eq.s32.totalorder %s31, 0
      %p254 = por %p252, %p253
      %s255 = ssub.s32 %s32, %s44
      %s256 = ssub.s32 %s33, %s40
      %s257 = sor.u32 %s255, %s256
      %p258 = scmp.eq.s32.totalorder %s257, 0
      %s260 = sadd.s32 %s259, 1
      %s261 = scalar_select %p258, %s259, %s260
      %p264 = pneg %p258
      %p265 = scmp.eq.s32.totalorder %s25, 3
      %p266 = por %p264, %p265
      %p267 = scmp.ne.s32.totalorder %s259, %s262
      %p268 = scmp.eq.s32.totalorder %s25, 0
      %p269 = por %p267, %p268
      %p270 = scmp.ne.s32.totalorder %s259, %s262
      %p271 = scmp.eq.s32.totalorder %s30, 3
      %p272 = por %p270, %p271
      %p273 = scmp.ne.s32.totalorder %s262, %s263
      %p274 = scmp.eq.s32.totalorder %s30, 0
      %p275 = por %p273, %p274
      %p276 = scmp.ne.s32.totalorder %s262, %s263
      %p277 = scmp.eq.s32.totalorder %s31, 3
      %p278 = por %p276, %p277
      %p280 = scmp.ne.s32.totalorder %s263, %s279
      %p281 = scmp.eq.s32.totalorder %s31, 0
      %p282 = por %p280, %p281
      %p283 = scmp.le.s32.totalorder 1, %s25
      %p284 = scmp.lt.s32.totalorder %s25, 5
      %p285 = pnand %p283, %p284
      %p286 = pneg %p285
      // Predicated region
      $region9: #{tpu_custom_call.1} parent=5 // pred_check
        _
      $region10: #{tpu_custom_call.1} parent=5 // pred_check_branch
        %288 = sbr.rel (%p285) target = $region12
      $region11: #{tpu_custom_call.1} parent=5 // pred_region
        %s289 = ssub.s32 %s25, 1
        // Predicated region
        $region13: #{tpu_custom_call.1} parent=11 // pred_check
          %p290 = pneg %p86
        $region14: #{tpu_custom_call.1} parent=11 // pred_check_branch
          %292 = sbr.rel (%p290) target = $region16
        $region15: #{tpu_custom_call.1} parent=11 // pred_region
          _
        $region16: #{tpu_custom_call.1} parent=11 // pred_fallthru
          _
        // Predicated region
        $region17: #{tpu_custom_call.1} parent=11 // pred_check
          %p293 = pneg %p107
        $region18: #{tpu_custom_call.1} parent=11 // pred_check_branch
          %295 = sbr.rel (%p293) target = $region20
        $region19: #{tpu_custom_call.1} parent=11 // pred_region
          _
        $region20: #{tpu_custom_call.1} parent=11 // pred_fallthru
          _
        // Predicated region
        $region21: #{tpu_custom_call.1} parent=11 // pred_check
          %p296 = pneg %p128
        $region22: #{tpu_custom_call.1} parent=11 // pred_check_branch
          %298 = sbr.rel (%p296) target = $region24
        $region23: #{tpu_custom_call.1} parent=11 // pred_region
          _
        $region24: #{tpu_custom_call.1} parent=11 // pred_fallthru
          _
        // Predicated region
        $region25: #{tpu_custom_call.1} parent=11 // pred_check
          %p299 = pneg %p149
        $region26: #{tpu_custom_call.1} parent=11 // pred_check_branch
          %301 = sbr.rel (%p299) target = $region28
        $region27: #{tpu_custom_call.1} parent=11 // pred_region
          _
        $region28: #{tpu_custom_call.1} parent=11 // pred_fallthru
          _
        // Predicated region
        $region29: #{tpu_custom_call.1} parent=11 // pred_check
          %p302 = pneg %p170
        $region30: #{tpu_custom_call.1} parent=11 // pred_check_branch
          %304 = sbr.rel (%p302) target = $region32
        $region31: #{tpu_custom_call.1} parent=11 // pred_region
          _
        $region32: #{tpu_custom_call.1} parent=11 // pred_fallthru
          _
        // Predicated region
        $region33: #{tpu_custom_call.1} parent=11 // pred_check
          %p305 = pneg %p191
        $region34: #{tpu_custom_call.1} parent=11 // pred_check_branch
          %307 = sbr.rel (%p305) target = $region36
        $region35: #{tpu_custom_call.1} parent=11 // pred_region
          _
        $region36: #{tpu_custom_call.1} parent=11 // pred_fallthru
          _
      $region12: #{tpu_custom_call.1} parent=5 // pred_fallthru
        _
      %p308 = scmp.lt.s32.totalorder %s25, 4
      // Predicated region
      $region37: #{tpu_custom_call.1} parent=5 // pred_check
        %p309 = pneg %p308
      $region38: #{tpu_custom_call.1} parent=5 // pred_check_branch
        %311 = sbr.rel (%p309) target = $region40
      $region39: #{tpu_custom_call.1} parent=5 // pred_region
        // Predicated region
        $region41: #{tpu_custom_call.1} parent=39 // pred_check
          %p312 = pneg %p59
        $region42: #{tpu_custom_call.1} parent=39 // pred_check_branch
          %314 = sbr.rel (%p312) target = $region44
        $region43: #{tpu_custom_call.1} parent=39 // pred_region
          %s315 = sand.u32 %s49, 1
          %s316 = scalar_lea.sflag [#allocation3], %s315
          %s317 = sand.u32 %s49, 1
          %s318 = smul.addr %s317, 16
          %s319 = scalar_lea.vmem [#allocation2], %s318
          %s321 = ssub.s32 256, 256
          %322 = vsyncadd %s316, %s321
          %s323 = smul.addr %s32, 4
          %s324 = sadd.s32 %s33, %s323
          %s325 = smul.addr %s324, 128
          %s326 = scalar_lea.hbm %s0, %s325
          %s327 = sshll.u32 %s319, 4
          %s328 = int_to_ptr.vmem [resolvable:$true] %s327
          %333 = dma.hbm_to_vmem [thread:$0]  %s326, 256, %s328, %s316, 256, 128, 8
        $region44: #{tpu_custom_call.1} parent=39 // pred_fallthru
          _
      $region40: #{tpu_custom_call.1} parent=5 // pred_fallthru
        _
      %p334 = scmp.le.s32.totalorder 1, %s25
      %p335 = scmp.lt.s32.totalorder %s25, 5
      %p336 = pnand %p334, %p335
      %p337 = pneg %p336
      // Predicated region
      $region45: #{tpu_custom_call.1} parent=5 // pred_check
        _
      $region46: #{tpu_custom_call.1} parent=5 // pred_check_branch
        %339 = sbr.rel (%p336) target = $region48
      $region47: #{tpu_custom_call.1} parent=5 // pred_region
        %s340 = ssub.s32 %s25, 1
        %s341 = sand.u32 %s52, 1
        %s342 = scalar_lea.sflag [#allocation3], %s341
        %s343 = sand.u32 %s52, 1
        %s344 = smul.addr %s343, 16
        %s345 = scalar_lea.vmem [#allocation2], %s344
        // Predicated region
        $region49: #{tpu_custom_call.1} parent=47 // pred_check
          %p346 = pneg %p65
        $region50: #{tpu_custom_call.1} parent=47 // pred_check_branch
          %348 = sbr.rel (%p346) target = $region52
        $region51: #{tpu_custom_call.1} parent=47 // pred_region
          %349 = dma.done %s342, 256
        $region52: #{tpu_custom_call.1} parent=47 // pred_fallthru
          _
        %s350 = sand.u32 %s52, 1
        %s351 = scalar_lea.sflag [#allocation3], %s350
        %s352 = sand.u32 %s52, 1
        %s353 = smul.addr %s352, 16
        %s354 = scalar_lea.vmem [#allocation2], %s353
        %p355 = pneg %p65
        %p356 = pneg %p62
        %p357 = pneg %p86
        %p358 = pneg %p83
        %p359 = pneg %p107
        %p360 = pneg %p104
        %p361 = pneg %p128
        %p362 = pneg %p125
        %p363 = pneg %p149
        %p364 = pneg %p146
        %p365 = pneg %p170
        %p366 = pneg %p167
        %p367 = pneg %p191
        %p368 = pneg %p188
        %p369 = pneg %p219
        %p370 = pneg %p216
        %s371 = sand.u32 %s206, 1
        %s372 = scalar_lea.sflag [#allocation4], %s371
        %s373 = sand.u32 %s206, 1
        %s374 = scalar_lea.vmem [#allocation5], %s373
        %p375 = pneg %p247
        %p376 = pneg %p244
        %s377 = sand.u32 %s30, 1
        %s378 = scalar_lea.sflag [#allocation7], %s377
        %s379 = sand.u32 %s234, 1
        %s380 = scalar_lea.vmem [#allocation6], %s379
        %p381 = pneg %p275
        %p382 = pneg %p272
        %s383 = sand.u32 %s30, 1
        %s384 = scalar_lea.sflag [#allocation7], %s383
        %s385 = sand.u32 %s262, 1
        %s386 = smul.addr %s385, 8
        %s387 = scalar_lea.vmem [#allocation8], %s386
        %v389 = vld [vmem:[%s345] sm:$0xff]
        %v390 = vld [vmem:[%s345 + $0x8] sm:$0xff]
        %v391 = vpack.c.bf16 %v390, %v389
        %v392 = vld [vmem:[%s1] sm:$0x1]
        %v393 = vld [vmem:[%s4] sm:$0x3]
        %395 = vset.pattern.permute.xlu0 0
        %396 = vperm.xlu0 %395, %v393
        %v397 = vpop.permute.xlu0 %396
        %vm399 = vcmask 130048
        %v401 = vsel %vm399, %v392, 0
        %403 = vmatprep.subr.bf16.mxu0 0
        %404 = vmatpush1.bf16.msra.mxu0 0
        %405 = vmatprep.subr.bf16.mxu0 0
        %406 = vmatpush1.bf16.msra.mxu0 0
        %407 = vmatprep.subr.bf16.mxu0 0
        %408 = vmatpush1.bf16.msra.mxu0 0
        %409 = vmatprep.subr.bf16.mxu0 0
        %410 = vmatpush1.bf16.msra.mxu0 0
        %411 = vmatprep.subr.bf16.mxu0 0
        %412 = vmatpush1.bf16.msra.mxu0 0
        %413 = vmatprep.subr.bf16.mxu0 0
        %414 = vmatpush1.bf16.msra.mxu0 0
        %415 = vmatprep.subr.bf16.mxu0 0
        %416 = vmatpush1.bf16.msra.mxu0 0
        %417 = vmatprep.subr.bf16.mxu0 0
        %418 = vmatpush1.bf16.msra.mxu0 %v391
        %419 = vmatprep.subr.bf16.mxu0 0
        %420 = vmatpush2.bf16.msra.mxu0 0
        %421 = vmatprep.subr.bf16.mxu0 0
        %422 = vmatpush2.bf16.msra.mxu0 0
        %423 = vmatprep.subr.bf16.mxu0 0
        %424 = vmatpush2.bf16.msra.mxu0 0
        %425 = vmatprep.subr.bf16.mxu0 0
        %426 = vmatpush2.bf16.msra.mxu0 0
        %427 = vmatprep.subr.bf16.mxu0 0
        %428 = vmatpush2.bf16.msra.mxu0 0
        %429 = vmatprep.subr.bf16.mxu0 0
        %430 = vmatpush2.bf16.msra.mxu0 0
        %431 = vmatprep.subr.bf16.mxu0 0
        %432 = vmatpush2.bf16.msra.mxu0 0
        %433 = vmatprep.subr.bf16.mxu0 0
        %434 = vmatpush2.bf16.msra.mxu0 0
        %435 = vmatprep.mubr.bf16.mxu0 0
        %436 = vmatmul.mubr.bf16.gmra.mxu0 %v401
        %v437 = vpop.f32.mrf.mxu0
        %v438 = vadd.f32 %v397, %v437
        %v439 = vpop.f32.mrf.mxu0
        %v440 = vpop.f32.mrf.mxu0
        %v441 = vpop.f32.mrf.mxu0
        %442 = vdwg.mxu0
        %v443 = vpack.c.bf16 %v438, %v438
        %444 = vst [vmem:[%s374] sm:$0x1] %v443
        %v445 = vld [vmem:[%s2] sm:$0x1]
        %v446 = vld [vmem:[%s5] sm:$0x3]
        %448 = vset.pattern.permute.xlu0 0
        %449 = vperm.xlu0 %448, %v446
        %v450 = vpop.permute.xlu0 %449
        %v453 = vsel %vm399, %v445, 0
        %455 = vmatprep.subr.bf16.mxu0 0
        %456 = vmatpush1.bf16.msra.mxu0 0
        %457 = vmatprep.subr.bf16.mxu0 0
        %458 = vmatpush1.bf16.msra.mxu0 0
        %459 = vmatprep.subr.bf16.mxu0 0
        %460 = vmatpush1.bf16.msra.mxu0 0
        %461 = vmatprep.subr.bf16.mxu0 0
        %462 = vmatpush1.bf16.msra.mxu0 0
        %463 = vmatprep.subr.bf16.mxu0 0
        %464 = vmatpush1.bf16.msra.mxu0 0
        %465 = vmatprep.subr.bf16.mxu0 0
        %466 = vmatpush1.bf16.msra.mxu0 0
        %467 = vmatprep.subr.bf16.mxu0 0
        %468 = vmatpush1.bf16.msra.mxu0 0
        %469 = vmatprep.subr.bf16.mxu0 0
        %470 = vmatpush1.bf16.msra.mxu0 %v391
        %471 = vmatprep.subr.bf16.mxu0 0
        %472 = vmatpush2.bf16.msra.mxu0 0
        %473 = vmatprep.subr.bf16.mxu0 0
        %474 = vmatpush2.bf16.msra.mxu0 0
        %475 = vmatprep.subr.bf16.mxu0 0
        %476 = vmatpush2.bf16.msra.mxu0 0
        %477 = vmatprep.subr.bf16.mxu0 0
        %478 = vmatpush2.bf16.msra.mxu0 0
        %479 = vmatprep.subr.bf16.mxu0 0
        %480 = vmatpush2.bf16.msra.mxu0 0
        %481 = vmatprep.subr.bf16.mxu0 0
        %482 = vmatpush2.bf16.msra.mxu0 0
        %483 = vmatprep.subr.bf16.mxu0 0
        %484 = vmatpush2.bf16.msra.mxu0 0
        %485 = vmatprep.subr.bf16.mxu0 0
        %486 = vmatpush2.bf16.msra.mxu0 0
        %487 = vmatprep.mubr.bf16.mxu0 0
        %488 = vmatmul.mubr.bf16.gmra.mxu0 %v453
        %v489 = vpop.f32.mrf.mxu0
        %v490 = vadd.f32 %v450, %v489
        %v491 = vpop.f32.mrf.mxu0
        %v492 = vpop.f32.mrf.mxu0
        %v493 = vpop.f32.mrf.mxu0
        %494 = vdwg.mxu0
        %v495 = vpack.c.bf16 %v490, %v490
        %496 = vst [vmem:[%s380] sm:$0x1] %v495
        %v497 = vld [vmem:[%s3] sm:$0xf]
        %v498 = vld [vmem:[%s3 + $0x4] sm:$0xf]
        %v499 = vld [vmem:[%s6] sm:$0xff]
        %v500 = vld [vmem:[%s6 + $0x8] sm:$0xff]
        %502 = vset.pattern.permute.xlu0 0
        %503 = vperm.xlu0 %502, %v499
        %v504 = vpop.permute.xlu0 %503
        %507 = vset.pattern.permute.xlu0 0
        %508 = vperm.xlu0 %507, %v500
        %v509 = vpop.permute.xlu0 %508
        %v513 = vunpack.c.l.b16 %v497
        %v514 = vunpack.c.l.b16 %v498
        %v515 = vpack.c.b16 %v514, %v513
        %v517 = vsel %vm399, %v515, 0
        %519 = vmatprep.subr.bf16.mxu0 0
        %520 = vmatpush1.bf16.msra.mxu0 0
        %521 = vmatprep.subr.bf16.mxu0 0
        %522 = vmatpush1.bf16.msra.mxu0 0
        %523 = vmatprep.subr.bf16.mxu0 0
        %524 = vmatpush1.bf16.msra.mxu0 0
        %525 = vmatprep.subr.bf16.mxu0 0
        %526 = vmatpush1.bf16.msra.mxu0 0
        %527 = vmatprep.subr.bf16.mxu0 0
        %528 = vmatpush1.bf16.msra.mxu0 0
        %529 = vmatprep.subr.bf16.mxu0 0
        %530 = vmatpush1.bf16.msra.mxu0 0
        %531 = vmatprep.subr.bf16.mxu0 0
        %532 = vmatpush1.bf16.msra.mxu0 0
        %533 = vmatprep.subr.bf16.mxu0 0
        %534 = vmatpush1.bf16.msra.mxu0 %v391
        %535 = vmatprep.subr.bf16.mxu0 0
        %536 = vmatpush2.bf16.msra.mxu0 0
        %537 = vmatprep.subr.bf16.mxu0 0
        %538 = vmatpush2.bf16.msra.mxu0 0
        %539 = vmatprep.subr.bf16.mxu0 0
        %540 = vmatpush2.bf16.msra.mxu0 0
        %541 = vmatprep.subr.bf16.mxu0 0
        %542 = vmatpush2.bf16.msra.mxu0 0
        %543 = vmatprep.subr.bf16.mxu0 0
        %544 = vmatpush2.bf16.msra.mxu0 0
        %545 = vmatprep.subr.bf16.mxu0 0
        %546 = vmatpush2.bf16.msra.mxu0 0
        %547 = vmatprep.subr.bf16.mxu0 0
        %548 = vmatpush2.bf16.msra.mxu0 0
        %549 = vmatprep.subr.bf16.mxu0 0
        %550 = vmatpush2.bf16.msra.mxu0 0
        %551 = vmatprep.mubr.bf16.mxu0 0
        %552 = vmatmul.mubr.bf16.gmra.mxu0 %v517
        %v553 = vpop.f32.mrf.mxu0
        %v554 = vadd.f32 %v504, %v553
        %v555 = vpop.f32.mrf.mxu0
        %v556 = vpop.f32.mrf.mxu0
        %v557 = vadd.f32 %v509, %v556
        %v558 = vpop.f32.mrf.mxu0
        %559 = vdwg.mxu0
        %v560 = vpack.c.bf16 %v557, %v554
        %v562 = vunpack.c.l.b16 %v560
        %v563 = vunpack.c.h.b16 %v560
        %v564 = vpack.c.b16 %v562, %v562
        %v565 = vpack.c.b16 %v563, %v563
        %568 = vst [vmem:[%s387] sm:$0xf] %v564
        %569 = vst [vmem:[%s387 + $0x4] sm:$0xf] %v565
        %s570 = sand.u32 %s206, 1
        %s571 = scalar_lea.sflag [#allocation4], %s570
        %s572 = sand.u32 %s206, 1
        %s573 = scalar_lea.vmem [#allocation5], %s572
        %s574 = sand.u32 %s30, 1
        %s575 = scalar_lea.sflag [#allocation7], %s574
        %s576 = sand.u32 %s234, 1
        %s577 = scalar_lea.vmem [#allocation6], %s576
        %s578 = sand.u32 %s30, 1
        %s579 = scalar_lea.sflag [#allocation7], %s578
        %s580 = sand.u32 %s262, 1
        %s581 = smul.addr %s580, 8
        %s582 = scalar_lea.vmem [#allocation8], %s581
        // Predicated region
        $region53: #{tpu_custom_call.1} parent=47 // pred_check
          %p583 = pneg %p216
        $region54: #{tpu_custom_call.1} parent=47 // pred_check_branch
          %585 = sbr.rel (%p583) target = $region56
        $region55: #{tpu_custom_call.1} parent=47 // pred_region
          %s587 = ssub.s32 16, 16
          %588 = vsyncadd %s571, %s587
          %s589 = smul.addr %s34, 2
          %s590 = sadd.s32 %s35, %s589
          %s591 = smul.addr %s590, 16
          %s592 = scalar_lea.hbm %s7, %s591
          %s594 = sshll.u32 %s573, 4
          %s595 = int_to_ptr.vmem [resolvable:$true] %s594
          %597 = dma.vmem_to_hbm [thread:$0]  %s595, 16, %s592, %s571
        $region56: #{tpu_custom_call.1} parent=47 // pred_fallthru
          _
        // Predicated region
        $region57: #{tpu_custom_call.1} parent=47 // pred_check
          %p598 = pneg %p244
        $region58: #{tpu_custom_call.1} parent=47 // pred_check_branch
          %600 = sbr.rel (%p598) target = $region60
        $region59: #{tpu_custom_call.1} parent=47 // pred_region
          %s602 = ssub.s32 16, 16
          %603 = vsyncadd %s575, %s602
          %s604 = smul.addr %s34, 2
          %s605 = sadd.s32 %s35, %s604
          %s606 = smul.addr %s605, 16
          %s607 = scalar_lea.hbm %s8, %s606
          %s609 = sshll.u32 %s577, 4
          %s610 = int_to_ptr.vmem [resolvable:$true] %s609
          %612 = dma.vmem_to_hbm [thread:$0]  %s610, 16, %s607, %s575
        $region60: #{tpu_custom_call.1} parent=47 // pred_fallthru
          _
        // Predicated region
        $region61: #{tpu_custom_call.1} parent=47 // pred_check
          %p613 = pneg %p272
        $region62: #{tpu_custom_call.1} parent=47 // pred_check_branch
          %615 = sbr.rel (%p613) target = $region64
        $region63: #{tpu_custom_call.1} parent=47 // pred_region
          %s617 = ssub.s32 128, 128
          %618 = vsyncadd %s579, %s617
          %s619 = smul.addr %s34, 4
          %s620 = sadd.s32 %s35, %s619
          %s621 = smul.addr %s620, 64
          %s622 = scalar_lea.hbm %s9, %s621
          %s623 = sshll.u32 %s582, 4
          %s624 = int_to_ptr.vmem [resolvable:$true] %s623
          %629 = dma.vmem_to_hbm [thread:$0]  %s624, 128, %s622, %s579, 64, 128, 4
        $region64: #{tpu_custom_call.1} parent=47 // pred_fallthru
          _
      $region48: #{tpu_custom_call.1} parent=5 // pred_fallthru
        _
      %p630 = scmp.le.s32.totalorder 2, %s25
      // Predicated region
      $region65: #{tpu_custom_call.1} parent=5 // pred_check
        %p631 = pneg %p630
      $region66: #{tpu_custom_call.1} parent=5 // pred_check_branch
        %633 = sbr.rel (%p631) target = $region68
      $region67: #{tpu_custom_call.1} parent=5 // pred_region
        %s634 = ssub.s32 %s25, 2
        // Predicated region
        $region69: #{tpu_custom_call.1} parent=67 // pred_check
          %p635 = pneg %p222
        $region70: #{tpu_custom_call.1} parent=67 // pred_check_branch
          %637 = sbr.rel (%p635) target = $region72
        $region71: #{tpu_custom_call.1} parent=67 // pred_region
          %s638 = sand.u32 %s207, 1
          %s639 = scalar_lea.sflag [#allocation4], %s638
          %s640 = sand.u32 %s207, 1
          %s641 = scalar_lea.vmem [#allocation5], %s640
          %642 = dma.done %s639, 16
        $region72: #{tpu_custom_call.1} parent=67 // pred_fallthru
          _
        // Predicated region
        $region73: #{tpu_custom_call.1} parent=67 // pred_check
          %p643 = pneg %p250
        $region74: #{tpu_custom_call.1} parent=67 // pred_check_branch
          %645 = sbr.rel (%p643) target = $region76
        $region75: #{tpu_custom_call.1} parent=67 // pred_region
          %s646 = sand.u32 %s31, 1
          %s647 = scalar_lea.sflag [#allocation7], %s646
          %s648 = sand.u32 %s235, 1
          %s649 = scalar_lea.vmem [#allocation6], %s648
          %650 = dma.done %s647, 16
        $region76: #{tpu_custom_call.1} parent=67 // pred_fallthru
          _
        // Predicated region
        $region77: #{tpu_custom_call.1} parent=67 // pred_check
          %p651 = pneg %p278
        $region78: #{tpu_custom_call.1} parent=67 // pred_check_branch
          %653 = sbr.rel (%p651) target = $region80
        $region79: #{tpu_custom_call.1} parent=67 // pred_region
          %s654 = sand.u32 %s31, 1
          %s655 = scalar_lea.sflag [#allocation7], %s654
          %s656 = sand.u32 %s263, 1
          %s657 = smul.addr %s656, 8
          %s658 = scalar_lea.vmem [#allocation8], %s657
          %659 = dma.done %s655, 128
        $region80: #{tpu_custom_call.1} parent=67 // pred_fallthru
          _
      $region68: #{tpu_custom_call.1} parent=5 // pred_fallthru
        _
    $region6: #{tpu_custom_call.1} parent=1 // loop_footer
      %s29 = sadd.s32 1, %s25
    $region7: #{tpu_custom_call.1} parent=1 // loop_footer_branch
      %24 = sbr.rel target = $region3
    $region8: #{tpu_custom_call.1} parent=1 // loop_exit
      _
    %660 = vsyncpa [#allocation3], 1
    %s661 = scalar_lea.sflag [#allocation3], 1
    %662 = vsyncpa %s661, 1
    %663 = vsyncpa [#allocation4], 1
    %s664 = scalar_lea.sflag [#allocation4], 1
    %665 = vsyncpa %s664, 1
    %666 = vsyncpa [#allocation7], 1
    %s667 = scalar_lea.sflag [#allocation7], 1
    %668 = vsyncpa %s667, 1

</llo_original>
